<compile_context>
chip_gen: v7x
topology: tpu7x:2x2x1
jax: 0.10.0
libtpu: 0.0.40
codegen_flags: <defaults>
</compile_context>

<pallas_src>
import functools

import jax
import jax.numpy as jnp
import numpy as np
from jax.experimental import pallas as pl
from jax.experimental.pallas import tpu as pltpu

K = 5          # conv kernel size
PAD = 2        # conv padding (same-length output for stride 1)
BN_EPS = 1e-5
LANE = 128
SUBLANE = 8


def _round_up(x, m):
    return (x + m - 1) // m * m


def _cat(parts, axis):
    return parts[0] if len(parts) == 1 else jnp.concatenate(parts, axis=axis)


def residual_block_kernel(x_ref, w1_ref, w2_ref, bias_ref, out_ref,
                          *, l_valid, batch_tile):
    """B samples per grid step, concatenated along the lane axis.

    x_ref   : (B, C_in_p, LP + 4*PAD)  bf16, zero-padded input (2*PAD halo per side)
    w1_ref  : (2*C_out_p, K*C_in_p)    bf16: [conv1*bn1 ; shortcut*bnsc on last tap]
    w2_ref  : (C_out_p, K*C_out_p)     bf16: conv2*bn2, im2col-flattened (k-major)
    bias_ref: (C_out_p, 3)             f32 folded-BN biases [b1, b2, bsc]
    out_ref : (B, C_out_p, LP)         f32, lane-dense; valid lanes [0, l_valid)
    """
    B = batch_tile
    lp = out_ref.shape[2]              # lane-padded length (multiple of 128)
    c_out_p = out_ref.shape[1]
    l_ext = lp + 2 * PAD               # extended conv1 output domain per sample

    b1 = bias_ref[:, 0:1]
    b2 = bias_ref[:, 1:2]
    bsc = bias_ref[:, 2:3]

    # ---- conv1 (+ fused 1x1 shortcut) over the extended domain: ONE matmul ----
    # xcol1[k*C_in_p + i, b*l_ext + m] = x[b, i, m + k]
    xcol1 = _cat(
        [_cat([x_ref[b, :, k:k + l_ext] for b in range(B)], axis=1)
         for k in range(K)], axis=0)                        # (K*C_in_p, B*l_ext) bf16
    h_big = jnp.dot(w1_ref[...], xcol1,
                    preferred_element_type=jnp.float32)     # (2*C_out_p, B*l_ext) f32

    h1 = h_big[:c_out_p]               # conv1 * bn1-scale (extended domain)
    sc_ext = h_big[c_out_p:]           # shortcut * bnsc-scale (last tap -> aligned)

    # bn1 bias + ReLU, then zero everything outside the true length so h1 becomes
    # exactly conv2's zero-padded input (all in vregs, no scratch round-trip).
    h1 = jnp.maximum(h1 + b1, 0.0)
    lane_idx = jax.lax.broadcasted_iota(jnp.int32, (c_out_p, l_ext), 1)
    seg_mask = (lane_idx >= PAD) & (lane_idx < PAD + l_valid)
    mask = _cat([seg_mask] * B, axis=1)
    h1 = jnp.where(mask, h1, 0.0).astype(jnp.bfloat16)

    # ---- conv2 + bn2: ONE matmul ----------------------------------------------
    xcol2 = _cat(
        [_cat([h1[:, b * l_ext + k: b * l_ext + k + lp] for b in range(B)], axis=1)
         for k in range(K)], axis=0)                        # (K*C_out_p, B*lp) bf16
    h2 = jnp.dot(w2_ref[...], xcol2,
                 preferred_element_type=jnp.float32)        # (C_out_p, B*lp) f32

    # ---- shortcut slice (start-aligned within each segment) -------------------
    sc = _cat([sc_ext[:, b * l_ext: b * l_ext + lp] for b in range(B)], axis=1)

    # ---- residual add + ReLU, full-width lane-dense stores --------------------
    y = jnp.maximum((h2 + b2) + (sc + bsc), 0.0)            # (C_out_p, B*lp)
    for b in range(B):
        out_ref[b] = y[:, b * lp:(b + 1) * lp]


def _fold_bn(bn, c_pad):
    gamma, beta, mean, var = bn
    scale = gamma.astype(jnp.float32) / jnp.sqrt(var.astype(jnp.float32) + BN_EPS)
    bias = beta.astype(jnp.float32) - mean.astype(jnp.float32) * scale
    scale = jnp.pad(scale, (0, c_pad - scale.shape[0]))
    bias = jnp.pad(bias, (0, c_pad - bias.shape[0]))
    return scale, bias


def residual_block(x_ncl, params, stride=1, batch_tile=None):
    """x_ncl: (N, C_in, L) float32 (PyTorch NCL). Returns (N, C_out, L) float32."""
    assert stride == 1, "TODO(synk): stride != 1 not implemented"
    N, C_in, L = x_ncl.shape
    C_out = params["w1"].shape[0]

    C_in_p = _round_up(C_in, SUBLANE)
    C_out_p = _round_up(C_out, SUBLANE)
    LP = _round_up(L, LANE)
    HALO = 2 * PAD
    Lin = LP + 2 * HALO

    # ---- batch tile: bound per-step VMEM, keep >= 2 parallel steps (v7x 2 TCs) ----
    per_sample_bytes = C_in_p * Lin * 2 + C_out_p * LP * 4      # bf16 in + f32 out
    b_vmem = max(1, (4 << 20) // per_sample_bytes)              # ~4 MiB per buffer set
    if batch_tile is None:
        batch_tile = max(1, min(b_vmem, pl.cdiv(N, 2)))
    B = batch_tile
    n_steps = pl.cdiv(N, B)
    N_pad = n_steps * B

    # NCL is already the desired (channels, length) sublane/lane layout.
    # Single zero-pad: batch -> tile multiple, channels -> sublane tile,
    # length -> halo + lane round-up.  bf16 I/O for the input.
    x_buf = jnp.pad(x_ncl.astype(jnp.float32),
                    ((0, N_pad - N), (0, C_in_p - C_in), (HALO, HALO + LP - L))
                    ).astype(jnp.bfloat16)

    # ---- fold BN scales into conv weights; flatten im2col (k-major) -------------
    s1, b1 = _fold_bn(params["bn1"], C_out_p)
    s2, b2 = _fold_bn(params["bn2"], C_out_p)

    def flat_w(w, scale, ci_p):
        co, ci, k = w.shape
        wf = w.astype(jnp.float32) * scale[:co, None, None]
        wp = jnp.pad(wf, ((0, C_out_p - co), (0, ci_p - ci), (0, 0)))
        return jnp.transpose(wp, (0, 2, 1)).reshape(C_out_p, k * ci_p)

    w1c = flat_w(params["w1"], s1, C_in_p)                      # (C_out_p, K*C_in_p)
    w2c = flat_w(params["w2"], s2, C_out_p).astype(jnp.bfloat16)

    # Shortcut (1x1 conv + bn, or identity when the module uses nn.Sequential()).
    if "wsc" in params:
        wsc_raw = params["wsc"][:, :, 0].astype(jnp.float32)
        bnsc = params["bnsc"]
    else:
        assert C_in == C_out
        wsc_raw = jnp.eye(C_out, C_in, dtype=jnp.float32)
        ones = jnp.ones((C_out,), jnp.float32)
        zeros = jnp.zeros((C_out,), jnp.float32)
        bnsc = (ones, zeros, zeros, ones)
    ssc, bsc = _fold_bn(bnsc, C_out_p)

    # Fuse shortcut into the conv1 matmul as an extra row block, placed on the LAST
    # tap so sc_ext[:, m] = wsc . x[:, m + 2*PAD]  =>  sc[t] = sc_ext[t] (aligned).
    wsc_p = jnp.pad(wsc_raw * ssc[:C_out, None],
                    ((0, C_out_p - C_out), (0, C_in_p - C_in)))
    wsc_block = jnp.zeros((C_out_p, K * C_in_p), jnp.float32)
    wsc_block = wsc_block.at[:, (K - 1) * C_in_p:].set(wsc_p)
    w1_big = jnp.concatenate([w1c, wsc_block], axis=0).astype(jnp.bfloat16)

    # Pack the three per-channel biases into a single small input.
    bias_pack = jnp.stack([b1, b2, bsc], axis=1)                # (C_out_p, 3) f32

    out = pl.pallas_call(
        functools.partial(residual_block_kernel, l_valid=L, batch_tile=B),
        out_shape=jax.ShapeDtypeStruct((N_pad, C_out_p, LP), jnp.float32),
        grid_spec=pltpu.PrefetchScalarGridSpec(
            num_scalar_prefetch=0,
            grid=(n_steps,),
            in_specs=[
                pl.BlockSpec((B, C_in_p, Lin), lambda n: (n, 0, 0)),
                pl.BlockSpec((2 * C_out_p, K * C_in_p), lambda n: (0, 0)),
                pl.BlockSpec((C_out_p, K * C_out_p), lambda n: (0, 0)),
                pl.BlockSpec((C_out_p, 3), lambda n: (0, 0)),
            ],
            out_specs=pl.BlockSpec((B, C_out_p, LP), lambda n: (n, 0, 0)),
        ),
        compiler_params=pltpu.CompilerParams(
            dimension_semantics=("parallel",),
            vmem_limit_bytes=32 * 1024 * 1024),
    )(x_buf, w1_big, w2c, bias_pack)

    # Slice away batch / channel / lane padding (tiny glue).
    return out[:N, :C_out, :L]


# ----------------- pure-JAX reference (for correctness check) -----------------
def conv1d_ref(x, w, pad):
    return jax.lax.conv_general_dilated(
        x, w, window_strides=(1,), padding=[(pad, pad)],
        dimension_numbers=("NCH", "OIH", "NCH"))


def bn_ref(x, gamma, beta, mean, var):
    g = gamma[None, :, None]
    b = beta[None, :, None]
    m = mean[None, :, None]
    v = var[None, :, None]
    return (x - m) / jnp.sqrt(v + BN_EPS) * g + b


def residual_block_ref(x, p):
    out = jax.nn.relu(bn_ref(conv1d_ref(x, p["w1"], PAD), *p["bn1"]))
    out = bn_ref(conv1d_ref(out, p["w2"], PAD), *p["bn2"])
    sc = bn_ref(conv1d_ref(x, p["wsc"], 0), *p["bnsc"])
    return jax.nn.relu(out + sc)


if __name__ == "__main__":
    N, C_in, C_out, L = 2, 4, 8, 16

    key = jax.random.PRNGKey(0)
    ks = jax.random.split(key, 16)

    def bn_params(k):
        k1, k2, k3, k4 = jax.random.split(k, 4)
        gamma = jax.random.uniform(k1, (C_out,), jnp.float32, 0.5, 1.5)
        beta = jax.random.normal(k2, (C_out,), jnp.float32) * 0.1
        mean = jax.random.normal(k3, (C_out,), jnp.float32) * 0.1
        var = jax.random.uniform(k4, (C_out,), jnp.float32, 0.5, 1.5)
        return (gamma, beta, mean, var)

    params = {
        "w1": jax.random.normal(ks[0], (C_out, C_in, K), jnp.float32) * 0.2,
        "w2": jax.random.normal(ks[1], (C_out, C_out, K), jnp.float32) * 0.2,
        "wsc": jax.random.normal(ks[2], (C_out, C_in, 1), jnp.float32) * 0.2,
        "bn1": bn_params(ks[3]),
        "bn2": bn_params(ks[4]),
        "bnsc": bn_params(ks[5]),
    }

    x = jax.random.normal(ks[6], (N, C_in, L), jnp.float32)

    out = residual_block(x, params)
    out = jax.block_until_ready(out)

    ref = residual_block_ref(x, params)
    # bf16 MXU operands (native single-pass path) => slightly looser tolerance vs
    # the f32 reference, as flagged in the perf review.
    np.testing.assert_allclose(np.asarray(out), np.asarray(ref),
                               rtol=5e-2, atol=5e-2)
    print("KERNEL_OK")
</pallas_src>

<mosaic_0001>
module attributes {stable_mosaic.version = 11 : i64} {
  func.func @residual_block_kernel(%arg0: i32, %arg1: memref<1x8x136xbf16, #tpu.memory_space<vmem>>, %arg2: memref<16x40xbf16, #tpu.memory_space<vmem>>, %arg3: memref<8x40xbf16, #tpu.memory_space<vmem>>, %arg4: memref<8x3xf32, #tpu.memory_space<vmem>>, %arg5: memref<1x8x128xf32, #tpu.memory_space<vmem>>) attributes {dimension_semantics = [#tpu.dimension_semantics<parallel>], iteration_bounds = array<i64: 2>, scalar_prefetch = 0 : i64, scratch_operands = 0 : i64, tpu.core_type = #tpu.core_type<tc>, window_params = [{transform_indices = @transform_0, window_bounds = array<i64: 1, 8, 136>}, {pipeline_mode = #tpu.pipeline_mode<synchronous>, transform_indices = @transform_1, window_bounds = array<i64: 16, 40>}, {pipeline_mode = #tpu.pipeline_mode<synchronous>, transform_indices = @transform_2, window_bounds = array<i64: 8, 40>}, {pipeline_mode = #tpu.pipeline_mode<synchronous>, transform_indices = @transform_3, window_bounds = array<i64: 8, 3>}, {transform_indices = @transform_4, window_bounds = array<i64: 1, 8, 128>}]} {
    %c0 = arith.constant 0 : index
    %c0_0 = arith.constant 0 : index
    %0 = vector.load %arg4[%c0, %c0_0] : memref<8x3xf32, #tpu.memory_space<vmem>>, vector<8x1xf32>
    %c0_1 = arith.constant 0 : index
    %c1 = arith.constant 1 : index
    %1 = vector.load %arg4[%c0_1, %c1] : memref<8x3xf32, #tpu.memory_space<vmem>>, vector<8x1xf32>
    %c0_2 = arith.constant 0 : index
    %c2 = arith.constant 2 : index
    %2 = vector.load %arg4[%c0_2, %c2] : memref<8x3xf32, #tpu.memory_space<vmem>>, vector<8x1xf32>
    %c0_3 = arith.constant 0 : index
    %c0_4 = arith.constant 0 : index
    %c0_5 = arith.constant 0 : index
    %3 = vector.load %arg1[%c0_3, %c0_4, %c0_5] : memref<1x8x136xbf16, #tpu.memory_space<vmem>>, vector<1x8x132xbf16>
    %4 = vector.shape_cast %3 : vector<1x8x132xbf16> to vector<8x132xbf16>
    %c0_6 = arith.constant 0 : index
    %c0_7 = arith.constant 0 : index
    %c1_8 = arith.constant 1 : index
    %5 = vector.load %arg1[%c0_6, %c0_7, %c1_8] : memref<1x8x136xbf16, #tpu.memory_space<vmem>>, vector<1x8x132xbf16>
    %6 = vector.shape_cast %5 : vector<1x8x132xbf16> to vector<8x132xbf16>
    %c0_9 = arith.constant 0 : index
    %c0_10 = arith.constant 0 : index
    %c2_11 = arith.constant 2 : index
    %7 = vector.load %arg1[%c0_9, %c0_10, %c2_11] : memref<1x8x136xbf16, #tpu.memory_space<vmem>>, vector<1x8x132xbf16>
    %8 = vector.shape_cast %7 : vector<1x8x132xbf16> to vector<8x132xbf16>
    %c0_12 = arith.constant 0 : index
    %c0_13 = arith.constant 0 : index
    %c3 = arith.constant 3 : index
    %9 = vector.load %arg1[%c0_12, %c0_13, %c3] : memref<1x8x136xbf16, #tpu.memory_space<vmem>>, vector<1x8x132xbf16>
    %10 = vector.shape_cast %9 : vector<1x8x132xbf16> to vector<8x132xbf16>
    %c0_14 = arith.constant 0 : index
    %c0_15 = arith.constant 0 : index
    %c4 = arith.constant 4 : index
    %11 = vector.load %arg1[%c0_14, %c0_15, %c4] : memref<1x8x136xbf16, #tpu.memory_space<vmem>>, vector<1x8x132xbf16>
    %12 = vector.shape_cast %11 : vector<1x8x132xbf16> to vector<8x132xbf16>
    %13 = tpu.concatenate %4, %6, %8, %10, %12 in 0 : vector<8x132xbf16>, vector<8x132xbf16>, vector<8x132xbf16>, vector<8x132xbf16>, vector<8x132xbf16> -> vector<40x132xbf16>
    %c0_16 = arith.constant 0 : index
    %c0_17 = arith.constant 0 : index
    %14 = vector.load %arg2[%c0_16, %c0_17] : memref<16x40xbf16, #tpu.memory_space<vmem>>, vector<16x40xbf16>
    %cst = arith.constant dense<0.000000e+00> : vector<16x132xf32>
    %15 = tpu.matmul %14, %13, %cst {dimension_numbers = #tpu.dot_dimension_numbers<[1], [0], [0], [1], [0, 0, 1, 1], [], []>} : vector<16x40xbf16>, vector<40x132xbf16>, vector<16x132xf32> -> vector<16x132xf32>
    %16 = vector.extract_strided_slice %15 {offsets = [0, 0], sizes = [8, 132], strides = [1, 1]} : vector<16x132xf32> to vector<8x132xf32>
    %17 = vector.extract_strided_slice %15 {offsets = [8, 0], sizes = [8, 132], strides = [1, 1]} : vector<16x132xf32> to vector<8x132xf32>
    %18 = vector.broadcast %0 : vector<8x1xf32> to vector<8x132xf32>
    %19 = arith.addf %16, %18 : vector<8x132xf32>
    %cst_18 = arith.constant 0.000000e+00 : f32
    %20 = vector.broadcast %cst_18 : f32 to vector<8x132xf32>
    %21 = arith.maximumf %19, %20 : vector<8x132xf32>
    %22 = tpu.iota {dimensions = array<i32: 1>} : vector<8x132xi32>
    %c2_i32 = arith.constant 2 : i32
    %23 = vector.broadcast %c2_i32 : i32 to vector<8x132xi32>
    %24 = arith.cmpi sge, %22, %23 : vector<8x132xi32>
    %c18_i32 = arith.constant 18 : i32
    %25 = vector.broadcast %c18_i32 : i32 to vector<8x132xi32>
    %26 = arith.cmpi slt, %22, %25 : vector<8x132xi32>
    %27 = arith.andi %24, %26 : vector<8x132xi1>
    %cst_19 = arith.constant 0.000000e+00 : f32
    %28 = vector.broadcast %cst_19 : f32 to vector<8x132xf32>
    %29 = arith.select %27, %21, %28 : vector<8x132xi1>, vector<8x132xf32>
    %30 = arith.truncf %29 : vector<8x132xf32> to vector<8x132xbf16>
    %31 = vector.extract_strided_slice %30 {offsets = [0, 0], sizes = [8, 128], strides = [1, 1]} : vector<8x132xbf16> to vector<8x128xbf16>
    %32 = vector.extract_strided_slice %30 {offsets = [0, 1], sizes = [8, 128], strides = [1, 1]} : vector<8x132xbf16> to vector<8x128xbf16>
    %33 = vector.extract_strided_slice %30 {offsets = [0, 2], sizes = [8, 128], strides = [1, 1]} : vector<8x132xbf16> to vector<8x128xbf16>
    %34 = vector.extract_strided_slice %30 {offsets = [0, 3], sizes = [8, 128], strides = [1, 1]} : vector<8x132xbf16> to vector<8x128xbf16>
    %35 = vector.extract_strided_slice %30 {offsets = [0, 4], sizes = [8, 128], strides = [1, 1]} : vector<8x132xbf16> to vector<8x128xbf16>
    %36 = tpu.concatenate %31, %32, %33, %34, %35 in 0 : vector<8x128xbf16>, vector<8x128xbf16>, vector<8x128xbf16>, vector<8x128xbf16>, vector<8x128xbf16> -> vector<40x128xbf16>
    %c0_20 = arith.constant 0 : index
    %c0_21 = arith.constant 0 : index
    %37 = vector.load %arg3[%c0_20, %c0_21] : memref<8x40xbf16, #tpu.memory_space<vmem>>, vector<8x40xbf16>
    %cst_22 = arith.constant dense<0.000000e+00> : vector<8x128xf32>
    %38 = tpu.matmul %37, %36, %cst_22 {dimension_numbers = #tpu.dot_dimension_numbers<[1], [0], [0], [1], [0, 0, 1, 1], [], []>} : vector<8x40xbf16>, vector<40x128xbf16>, vector<8x128xf32> -> vector<8x128xf32>
    %39 = vector.extract_strided_slice %17 {offsets = [0, 0], sizes = [8, 128], strides = [1, 1]} : vector<8x132xf32> to vector<8x128xf32>
    %40 = vector.broadcast %1 : vector<8x1xf32> to vector<8x128xf32>
    %41 = arith.addf %38, %40 : vector<8x128xf32>
    %42 = vector.broadcast %2 : vector<8x1xf32> to vector<8x128xf32>
    %43 = arith.addf %39, %42 : vector<8x128xf32>
    %44 = arith.addf %41, %43 : vector<8x128xf32>
    %cst_23 = arith.constant 0.000000e+00 : f32
    %45 = vector.broadcast %cst_23 : f32 to vector<8x128xf32>
    %46 = arith.maximumf %44, %45 : vector<8x128xf32>
    %c0_24 = arith.constant 0 : index
    %c0_25 = arith.constant 0 : index
    %c0_26 = arith.constant 0 : index
    %47 = vector.load %arg5[%c0_24, %c0_25, %c0_26] : memref<1x8x128xf32, #tpu.memory_space<vmem>>, vector<1x8x128xf32>
    %48 = vector.shape_cast %47 : vector<1x8x128xf32> to vector<8x128xf32>
    %49 = vector.shape_cast %46 : vector<8x128xf32> to vector<1x8x128xf32>
    tpu.vector_store %arg5[%c0_24, %c0_25, %c0_26], %49 {strides = array<i32>} : memref<1x8x128xf32, #tpu.memory_space<vmem>>, vector<1x8x128xf32>,
    return
  }
  func.func @transform_0(%arg0: i32) -> (i32, i32, i32) {
    %c0_i32 = arith.constant 0 : i32
    %c0_i32_0 = arith.constant 0 : i32
    %c0_i32_1 = arith.constant 0 : i32
    return %arg0, %c0_i32, %c0_i32_0 : i32, i32, i32
  }
  func.func @transform_1(%arg0: i32) -> (i32, i32) {
    %c0_i32 = arith.constant 0 : i32
    %c0_i32_0 = arith.constant 0 : i32
    %c0_i32_1 = arith.constant 0 : i32
    return %c0_i32, %c0_i32_0 : i32, i32
  }
  func.func @transform_2(%arg0: i32) -> (i32, i32) {
    %c0_i32 = arith.constant 0 : i32
    %c0_i32_0 = arith.constant 0 : i32
    %c0_i32_1 = arith.constant 0 : i32
    return %c0_i32, %c0_i32_0 : i32, i32
  }
  func.func @transform_3(%arg0: i32) -> (i32, i32) {
    %c0_i32 = arith.constant 0 : i32
    %c0_i32_0 = arith.constant 0 : i32
    %c0_i32_1 = arith.constant 0 : i32
    return %c0_i32, %c0_i32_0 : i32, i32
  }
  func.func @transform_4(%arg0: i32) -> (i32, i32, i32) {
    %c0_i32 = arith.constant 0 : i32
    %c0_i32_0 = arith.constant 0 : i32
    %c0_i32_1 = arith.constant 0 : i32
    return %arg0, %c0_i32, %c0_i32_0 : i32, i32, i32
  }
}

</mosaic_0001>

<llo_original>
// kernel: tpu_custom_call.1
$region0: #{tpu_custom_call.1}
  #allocation0 [shape = 'u32[]', space=smem, size = 0x4, offset = 0x4, fixed_abs, tag = 'smem constant byte address 0x4 - core index']
  #allocation1 [shape = 'u32[144,128]{1,0:T(1,128)}', space=vmem, size = 0x12000, scoped, tag = 'internal scratch']
  %s0 = inlined_call_operand.hbm [shape: bf16[2,8,136], index: 0, kind: input, shape index: {}]
  %s1 = inlined_call_operand.vmem [shape: bf16[16,40], index: 1, kind: input, shape index: {}]
  %s2 = inlined_call_operand.vmem [shape: bf16[8,40], index: 2, kind: input, shape index: {}]
  %s3 = inlined_call_operand.vmem [shape: f32[8,3], index: 3, kind: input, shape index: {}]
  %s4 = inlined_call_operand.hbm [shape: f32[2,8,128], index: 4, kind: output, shape index: {}]
  %s5 = sld [smem:[#allocation0]]
  $region53: #{tpu_custom_call.1} parent=0
    _
  %s7 = ssub.s32 1, %s5
  %s8 = scalar_select 0, %s7, %s5
  $region1: #{tpu_custom_call.1} parent=0
    #allocation2 [shape = 'u8[8192]{0}', space=vmem, size = 0x2000, scoped, tag = 'input window, operand 0']
    #allocation3 [shape = 's32[2]{0}', space=sflag, size = 0x8, scoped, tag = 'scoped memory for tpu_custom_call.1']
    #allocation4 [shape = 's32[2]{0}', space=sflag, size = 0x8, scoped, tag = 'scoped memory for tpu_custom_call.1']
    #allocation5 [shape = 'u8[8192]{0}', space=vmem, size = 0x2000, scoped, tag = 'output window, operand 0']
    %9 = vsyncpa [#allocation3], 0
    %s10 = scalar_lea.sflag [#allocation3], 1
    %11 = vsyncpa %s10, 0
    %12 = vsyncpa [#allocation4], 0
    %s13 = scalar_lea.sflag [#allocation4], 1
    %14 = vsyncpa %s13, 0
    loop: start=0, step=1, limit=4
    $region2: #{tpu_custom_call.1} parent=1 // loop_pre_header
      _
    $region3: #{tpu_custom_call.1} parent=1 // loop_header
      %s16 = sphi 0, %s20
      %p17 = scmp.ge.s32.totalorder %s16, 4
      %s26 = sphi 0, %s28
      %s29 = sphi 0, %s26
      %s30 = sphi 0, %s29
      %s46 = sphi 0, %s30
      %s50 = sphi 0, %s50
      %s52 = sphi 0, %s50
      %s53 = sphi 0, %s52
      %s67 = sphi 0, %s53
      %s71 = sphi 0, %s71
      %s73 = sphi 0, %s71
      %s74 = sphi 0, %s73
      %s88 = sphi 0, %s74
      %s92 = sphi 0, %s92
      %s94 = sphi 0, %s92
      %s95 = sphi 0, %s94
      %s109 = sphi 0, %s95
      %s115 = sphi 0, %s117
      %s118 = sphi 0, %s115
      %s119 = sphi 0, %s118
      %s135 = sphi 0, %s119
    $region4: #{tpu_custom_call.1} parent=1 // loop_header_branch
      %19 = sbr.rel (%p17) target = $region8
    $region5: #{tpu_custom_call.1} parent=1 // loop_body
      %s21 = ssub.s32 %s16, 1
      %s22 = ssub.s32 %s16, 2
      %s23 = sadd.s32 %s16, 1
      %s24 = ssub.s32 %s16, %s23
      %p25 = scmp.eq.s32.totalorder %s24, 0
      %s27 = sadd.s32 %s26, 1
      %s28 = scalar_select %p25, %s26, %s27
      %p31 = pneg %p25
      %p32 = scmp.eq.s32.totalorder %s16, 1
      %p33 = por %p31, %p32
      %p34 = scmp.ne.s32.totalorder %s26, %s29
      %p35 = scmp.eq.s32.totalorder %s16, 0
      %p36 = por %p34, %p35
      %p37 = scmp.ne.s32.totalorder %s26, %s29
      %p38 = scmp.eq.s32.totalorder %s21, 1
      %p39 = por %p37, %p38
      %p40 = scmp.ne.s32.totalorder %s29, %s30
      %p41 = scmp.eq.s32.totalorder %s21, 0
      %p42 = por %p40, %p41
      %p43 = scmp.ne.s32.totalorder %s29, %s30
      %p44 = scmp.eq.s32.totalorder %s22, 1
      %p45 = por %p43, %p44
      %p47 = scmp.ne.s32.totalorder %s30, %s46
      %p48 = scmp.eq.s32.totalorder %s22, 0
      %p49 = por %p47, %p48
      %s51 = sadd.s32 %s50, 1
      %p54 = scmp.eq.s32.totalorder %s16, 1
      %p55 = scmp.ne.s32.totalorder %s50, %s52
      %p56 = scmp.eq.s32.totalorder %s16, 0
      %p57 = por %p55, %p56
      %p58 = scmp.ne.s32.totalorder %s50, %s52
      %p59 = scmp.eq.s32.totalorder %s21, 1
      %p60 = por %p58, %p59
      %p61 = scmp.ne.s32.totalorder %s52, %s53
      %p62 = scmp.eq.s32.totalorder %s21, 0
      %p63 = por %p61, %p62
      %p64 = scmp.ne.s32.totalorder %s52, %s53
      %p65 = scmp.eq.s32.totalorder %s22, 1
      %p66 = por %p64, %p65
      %p68 = scmp.ne.s32.totalorder %s53, %s67
      %p69 = scmp.eq.s32.totalorder %s22, 0
      %p70 = por %p68, %p69
      %s72 = sadd.s32 %s71, 1
      %p75 = scmp.eq.s32.totalorder %s16, 1
      %p76 = scmp.ne.s32.totalorder %s71, %s73
      %p77 = scmp.eq.s32.totalorder %s16, 0
      %p78 = por %p76, %p77
      %p79 = scmp.ne.s32.totalorder %s71, %s73
      %p80 = scmp.eq.s32.totalorder %s21, 1
      %p81 = por %p79, %p80
      %p82 = scmp.ne.s32.totalorder %s73, %s74
      %p83 = scmp.eq.s32.totalorder %s21, 0
      %p84 = por %p82, %p83
      %p85 = scmp.ne.s32.totalorder %s73, %s74
      %p86 = scmp.eq.s32.totalorder %s22, 1
      %p87 = por %p85, %p86
      %p89 = scmp.ne.s32.totalorder %s74, %s88
      %p90 = scmp.eq.s32.totalorder %s22, 0
      %p91 = por %p89, %p90
      %s93 = sadd.s32 %s92, 1
      %p96 = scmp.eq.s32.totalorder %s16, 1
      %p97 = scmp.ne.s32.totalorder %s92, %s94
      %p98 = scmp.eq.s32.totalorder %s16, 0
      %p99 = por %p97, %p98
      %p100 = scmp.ne.s32.totalorder %s92, %s94
      %p101 = scmp.eq.s32.totalorder %s21, 1
      %p102 = por %p100, %p101
      %p103 = scmp.ne.s32.totalorder %s94, %s95
      %p104 = scmp.eq.s32.totalorder %s21, 0
      %p105 = por %p103, %p104
      %p106 = scmp.ne.s32.totalorder %s94, %s95
      %p107 = scmp.eq.s32.totalorder %s22, 1
      %p108 = por %p106, %p107
      %p110 = scmp.ne.s32.totalorder %s95, %s109
      %p111 = scmp.eq.s32.totalorder %s22, 0
      %p112 = por %p110, %p111
      %s113 = ssub.s32 %s16, %s23
      %p114 = scmp.eq.s32.totalorder %s113, 0
      %s116 = sadd.s32 %s115, 1
      %s117 = scalar_select %p114, %s115, %s116
      %p120 = pneg %p114
      %p121 = scmp.eq.s32.totalorder %s16, 1
      %p122 = por %p120, %p121
      %p123 = scmp.ne.s32.totalorder %s115, %s118
      %p124 = scmp.eq.s32.totalorder %s16, 0
      %p125 = por %p123, %p124
      %p126 = scmp.ne.s32.totalorder %s115, %s118
      %p127 = scmp.eq.s32.totalorder %s21, 1
      %p128 = por %p126, %p127
      %p129 = scmp.ne.s32.totalorder %s118, %s119
      %p130 = scmp.eq.s32.totalorder %s21, 0
      %p131 = por %p129, %p130
      %p132 = scmp.ne.s32.totalorder %s118, %s119
      %p133 = scmp.eq.s32.totalorder %s22, 1
      %p134 = por %p132, %p133
      %p136 = scmp.ne.s32.totalorder %s119, %s135
      %p137 = scmp.eq.s32.totalorder %s22, 0
      %p138 = por %p136, %p137
      %p139 = scmp.le.s32.totalorder 1, %s16
      %p140 = scmp.lt.s32.totalorder %s16, 3
      %p141 = pnand %p139, %p140
      %p142 = pneg %p141
      // Predicated region
      $region9: #{tpu_custom_call.1} parent=5 // pred_check
        _
      $region10: #{tpu_custom_call.1} parent=5 // pred_check_branch
        %144 = sbr.rel (%p141) target = $region12
      $region11: #{tpu_custom_call.1} parent=5 // pred_region
        %s145 = ssub.s32 %s16, 1
        // Predicated region
        $region13: #{tpu_custom_call.1} parent=11 // pred_check
          %p146 = pneg %p63
        $region14: #{tpu_custom_call.1} parent=11 // pred_check_branch
          %148 = sbr.rel (%p146) target = $region16
        $region15: #{tpu_custom_call.1} parent=11 // pred_region
          _
        $region16: #{tpu_custom_call.1} parent=11 // pred_fallthru
          _
        // Predicated region
        $region17: #{tpu_custom_call.1} parent=11 // pred_check
          %p149 = pneg %p84
        $region18: #{tpu_custom_call.1} parent=11 // pred_check_branch
          %151 = sbr.rel (%p149) target = $region20
        $region19: #{tpu_custom_call.1} parent=11 // pred_region
          _
        $region20: #{tpu_custom_call.1} parent=11 // pred_fallthru
          _
        // Predicated region
        $region21: #{tpu_custom_call.1} parent=11 // pred_check
          %p152 = pneg %p105
        $region22: #{tpu_custom_call.1} parent=11 // pred_check_branch
          %154 = sbr.rel (%p152) target = $region24
        $region23: #{tpu_custom_call.1} parent=11 // pred_region
          _
        $region24: #{tpu_custom_call.1} parent=11 // pred_fallthru
          _
      $region12: #{tpu_custom_call.1} parent=5 // pred_fallthru
        _
      %p155 = scmp.lt.s32.totalorder %s16, 2
      // Predicated region
      $region25: #{tpu_custom_call.1} parent=5 // pred_check
        %p156 = pneg %p155
      $region26: #{tpu_custom_call.1} parent=5 // pred_check_branch
        %158 = sbr.rel (%p156) target = $region28
      $region27: #{tpu_custom_call.1} parent=5 // pred_region
        // Predicated region
        $region29: #{tpu_custom_call.1} parent=27 // pred_check
          %p159 = pneg %p36
        $region30: #{tpu_custom_call.1} parent=27 // pred_check_branch
          %161 = sbr.rel (%p159) target = $region32
        $region31: #{tpu_custom_call.1} parent=27 // pred_region
          %s162 = sand.u32 %s26, 1
          %s163 = scalar_lea.sflag [#allocation3], %s162
          %s164 = sand.u32 %s26, 1
          %s165 = smul.addr %s164, 8
          %s166 = scalar_lea.vmem [#allocation2], %s165
          %s168 = ssub.s32 128, 128
          %169 = vsyncadd %s163, %s168
          %s170 = smul.addr %s16, 2
          %s171 = smul.addr %s170, 64
          %s172 = scalar_lea.hbm %s0, %s171
          %s174 = sshll.u32 %s166, 4
          %s175 = int_to_ptr.vmem [resolvable:$true] %s174
          %177 = dma.hbm_to_vmem [thread:$0]  %s172, 128, %s175, %s163
        $region32: #{tpu_custom_call.1} parent=27 // pred_fallthru
          _
      $region28: #{tpu_custom_call.1} parent=5 // pred_fallthru
        _
      %p178 = scmp.le.s32.totalorder 1, %s16
      %p179 = scmp.lt.s32.totalorder %s16, 3
      %p180 = pnand %p178, %p179
      %p181 = pneg %p180
      // Predicated region
      $region33: #{tpu_custom_call.1} parent=5 // pred_check
        _
      $region34: #{tpu_custom_call.1} parent=5 // pred_check_branch
        %183 = sbr.rel (%p180) target = $region36
      $region35: #{tpu_custom_call.1} parent=5 // pred_region
        %s184 = ssub.s32 %s16, 1
        %s185 = sand.u32 %s29, 1
        %s186 = scalar_lea.sflag [#allocation3], %s185
        %s187 = sand.u32 %s29, 1
        %s188 = smul.addr %s187, 8
        %s189 = scalar_lea.vmem [#allocation2], %s188
        // Predicated region
        $region37: #{tpu_custom_call.1} parent=35 // pred_check
          %p190 = pneg %p42
        $region38: #{tpu_custom_call.1} parent=35 // pred_check_branch
          %192 = sbr.rel (%p190) target = $region40
        $region39: #{tpu_custom_call.1} parent=35 // pred_region
          %193 = dma.done %s186, 128
        $region40: #{tpu_custom_call.1} parent=35 // pred_fallthru
          _
        %s194 = sand.u32 %s29, 1
        %s195 = scalar_lea.sflag [#allocation3], %s194
        %s196 = sand.u32 %s29, 1
        %s197 = smul.addr %s196, 8
        %s198 = scalar_lea.vmem [#allocation2], %s197
        %p199 = pneg %p42
        %p200 = pneg %p39
        %p201 = pneg %p63
        %p202 = pneg %p60
        %p203 = pneg %p84
        %p204 = pneg %p81
        %p205 = pneg %p105
        %p206 = pneg %p102
        %p207 = pneg %p131
        %p208 = pneg %p128
        %s209 = sand.u32 %s118, 1
        %s210 = scalar_lea.sflag [#allocation4], %s209
        %s211 = sand.u32 %s118, 1
        %s212 = smul.addr %s211, 8
        %s213 = scalar_lea.vmem [#allocation5], %s212
        %v215 = vld [vmem:[%s3] sm:$0xff]
        %v216 = vld [vmem:[%s189] sm:$0xff]
        %v218 = vunpack.c.l.b16 %v216
        %v219 = vunpack.c.h.b16 %v216
        %v220 = vpack.c.b16 %v218, %v218
        %v221 = vpack.c.b16 %v219, %v219
        %222 = vrot.lane.b32.xlu0 %v220, 127
        %v223 = vpop.permute.xlu0 %222
        %224 = vrot.lane.b32.xlu0 %v221, 127
        %v225 = vpop.permute.xlu0 %224
        %vm226 = vcmask 1039360
        %v227 = vsel %vm226, %v223, %v225
        %228 = vrot.lane.b32.xlu0 %v220, 126
        %v229 = vpop.permute.xlu0 %228
        %230 = vrot.lane.b32.xlu0 %v221, 126
        %v231 = vpop.permute.xlu0 %230
        %vm232 = vcmask 1031168
        %v233 = vsel %vm232, %v229, %v231
        %234 = vrot.lane.b32.xlu0 %v220, 125
        %v235 = vpop.permute.xlu0 %234
        %236 = vrot.lane.b32.xlu0 %v221, 125
        %v237 = vpop.permute.xlu0 %236
        %vm238 = vcmask 1022976
        %v239 = vsel %vm238, %v235, %v237
        %240 = vrot.lane.b32.xlu0 %v220, 124
        %v241 = vpop.permute.xlu0 %240
        %242 = vrot.lane.b32.xlu0 %v221, 124
        %v243 = vpop.permute.xlu0 %242
        %vm244 = vcmask 1014784
        %v245 = vsel %vm244, %v241, %v243
        %vm246 = vcmask 1043456
        %v249 = vsel %vm246, %v220, %v227
        %v253 = vsel %vm246, %v221, %v225
        %v257 = vsel %vm246, %v233, %v239
        %v261 = vsel %vm246, %v231, %v237
        %v263 = vld [vmem:[%s1] sm:$0xf]
        %v264 = vld [vmem:[%s1 + $0x4] sm:$0xf]
        %v267 = vunpack.c.l.b16 %v263
        %v268 = vunpack.c.l.b16 %v264
        %v269 = vpack.c.b16 %v268, %v267
        %vm270 = vcmask 326656
        %v272 = vsel %vm270, %v269, 0
        %v275 = vsel %vm246, %v245, 0
        %v278 = vsel %vm246, %v243, 0
        %280 = vmatprep.subr.bf16.mxu0 %v253
        %281 = vmatpush1.bf16.msra.mxu0 %v249
        %282 = vmatprep.subr.bf16.mxu0 %v261
        %283 = vmatpush1.bf16.msra.mxu0 %v257
        %284 = vmatprep.subr.bf16.mxu0 %v278
        %285 = vmatpush1.bf16.msra.mxu0 %v275
        %286 = vmatprep.subr.bf16.mxu0 0
        %287 = vmatpush1.bf16.msra.mxu0 0
        %288 = vmatprep.subr.bf16.mxu0 0
        %289 = vmatpush1.bf16.msra.mxu0 0
        %290 = vmatprep.subr.bf16.mxu0 0
        %291 = vmatpush1.bf16.msra.mxu0 0
        %292 = vmatprep.subr.bf16.mxu0 0
        %293 = vmatpush1.bf16.msra.mxu0 0
        %294 = vmatprep.subr.bf16.mxu0 0
        %295 = vmatpush1.bf16.msra.mxu0 0
        %296 = vmatprep.subr.bf16.mxu0 0
        %297 = vmatpush1.bf16.msra.mxu0 0
        %298 = vmatprep.subr.bf16.mxu0 0
        %299 = vmatpush1.bf16.msra.mxu0 0
        %300 = vmatprep.subr.bf16.mxu0 0
        %301 = vmatpush1.bf16.msra.mxu0 0
        %302 = vmatprep.subr.bf16.mxu0 0
        %303 = vmatpush1.bf16.msra.mxu0 0
        %304 = vmatprep.subr.bf16.mxu0 0
        %305 = vmatpush1.bf16.msra.mxu0 0
        %306 = vmatprep.subr.bf16.mxu0 0
        %307 = vmatpush1.bf16.msra.mxu0 0
        %308 = vmatprep.subr.bf16.mxu0 0
        %309 = vmatpush1.bf16.msra.mxu0 0
        %310 = vmatprep.subr.bf16.mxu0 0
        %311 = vmatpush1.bf16.msra.mxu0 0
        %312 = vmatprep.mubr.bf16.mxu0 0
        %313 = vmatmul.mubr.bf16.gmra.mrb[0].mxu0 %v272
        %v314 = vpop.f32.mrb[0].mxu0
        %v315 = vadd.f32 0.0, %v314
        %v316 = vpop.f32.mrb[0].mxu0
        %v317 = vadd.f32 0.0, %v316
        %v318 = vpop.f32.mrb[0].mxu0
        %v319 = vadd.f32 0.0, %v318
        %v320 = vpop.f32.mrb[0].mxu0
        %321 = vdwg.mxu0
        %323 = vset.pattern.permute.xlu0 0
        %324 = vperm.xlu0 %323, %v215
        %v325 = vpop.permute.xlu0 %324
        %v327 = vadd.f32 %v315, %v325
        %v328 = vadd.f32 %v317, %v325
        %v329 = vmax.f32 %v327, 0.0
        %v330 = vmax.f32 %v328, 0.0
        %v331 = vlaneseq
        %v332 = vand.u32 %v331, 127
        %v333 = vadd.s32 %v332, 128
        %vm334 = vcmp.ge.s32.totalorder %v332, 2
        %vm335 = vcmp.ge.s32.totalorder %v333, 2
        %vm336 = vcmp.lt.s32.totalorder %v332, 18
        %vm337 = vcmp.lt.s32.totalorder %v333, 18
        %vm338 = vmand %vm334, %vm336
        %vm339 = vmand %vm335, %vm337
        %v340 = vsel %vm338, %v329, 0.0
        %v341 = vsel %vm339, %v330, 0.0
        %v342 = vpack.c.bf16 %v340, %v340
        %v343 = vpack.c.bf16 %v341, %v341
        %v346 = vrot.slane %v342, 4
        %v347 = vrot.slane %v343, 4
        %348 = vrot.lane.b32.xlu0 %v346, 127
        %v349 = vpop.permute.xlu0 %348
        %350 = vrot.lane.b32.xlu0 %v347, 127
        %v351 = vpop.permute.xlu0 %350
        %v352 = vsel %vm226, %v349, %v351
        %353 = vrot.lane.b32.xlu0 %v342, 126
        %v354 = vpop.permute.xlu0 %353
        %355 = vrot.lane.b32.xlu0 %v343, 126
        %v356 = vpop.permute.xlu0 %355
        %v357 = vsel %vm232, %v354, %v356
        %358 = vrot.lane.b32.xlu0 %v346, 125
        %v359 = vpop.permute.xlu0 %358
        %360 = vrot.lane.b32.xlu0 %v347, 125
        %v361 = vpop.permute.xlu0 %360
        %v362 = vsel %vm238, %v359, %v361
        %363 = vrot.lane.b32.xlu0 %v342, 124
        %v364 = vpop.permute.xlu0 %363
        %365 = vrot.lane.b32.xlu0 %v343, 124
        %v366 = vpop.permute.xlu0 %365
        %v367 = vsel %vm244, %v364, %v366
        %v370 = vsel %vm246, %v342, %v352
        %v374 = vsel %vm246, %v357, %v362
        %v376 = vld [vmem:[%s2] sm:$0xf]
        %377 = vset.pattern.permute.xlu0 1
        %378 = vperm.xlu0 %377, %v215
        %v379 = vpop.permute.xlu0 %378
        %v382 = vsel %vm270, %v376, 0
        %v385 = vsel %vm246, %v367, 0
        %387 = vmatprep.subr.bf16.mxu0 0
        %388 = vmatpush1.bf16.msra.mxu0 %v370
        %389 = vmatprep.subr.bf16.mxu0 0
        %390 = vmatpush1.bf16.msra.mxu0 %v374
        %391 = vmatprep.subr.bf16.mxu0 0
        %392 = vmatpush1.bf16.msra.mxu0 %v385
        %393 = vmatprep.subr.bf16.mxu0 0
        %394 = vmatpush1.bf16.msra.mxu0 0
        %395 = vmatprep.subr.bf16.mxu0 0
        %396 = vmatpush1.bf16.msra.mxu0 0
        %397 = vmatprep.subr.bf16.mxu0 0
        %398 = vmatpush1.bf16.msra.mxu0 0
        %399 = vmatprep.subr.bf16.mxu0 0
        %400 = vmatpush1.bf16.msra.mxu0 0
        %401 = vmatprep.subr.bf16.mxu0 0
        %402 = vmatpush1.bf16.msra.mxu0 0
        %403 = vmatprep.subr.bf16.mxu0 0
        %404 = vmatpush1.bf16.msra.mxu0 0
        %405 = vmatprep.subr.bf16.mxu0 0
        %406 = vmatpush1.bf16.msra.mxu0 0
        %407 = vmatprep.subr.bf16.mxu0 0
        %408 = vmatpush1.bf16.msra.mxu0 0
        %409 = vmatprep.subr.bf16.mxu0 0
        %410 = vmatpush1.bf16.msra.mxu0 0
        %411 = vmatprep.subr.bf16.mxu0 0
        %412 = vmatpush1.bf16.msra.mxu0 0
        %413 = vmatprep.subr.bf16.mxu0 0
        %414 = vmatpush1.bf16.msra.mxu0 0
        %415 = vmatprep.subr.bf16.mxu0 0
        %416 = vmatpush1.bf16.msra.mxu0 0
        %417 = vmatprep.subr.bf16.mxu0 0
        %418 = vmatpush1.bf16.msra.mxu0 0
        %419 = vmatprep.mubr.bf16.mxu0 0
        %420 = vmatmul.mubr.bf16.gmra.mrb[0].mxu0 %v382
        %v421 = vpop.f32.mrb[0].mxu0
        %v422 = vadd.f32 %v379, %v421
        %v423 = vpop.f32.mrb[0].mxu0
        %v424 = vpop.f32.mrb[0].mxu0
        %v425 = vpop.f32.mrb[0].mxu0
        %426 = vdwg.mxu0
        %427 = vset.pattern.permute.xlu0 2
        %428 = vperm.xlu0 %427, %v215
        %v429 = vpop.permute.xlu0 %428
        %v431 = vadd.f32 %v319, %v429
        %v432 = vadd.f32 %v422, %v431
        %v433 = vmax.f32 %v432, 0.0
        %434 = vst [vmem:[%s213] sm:$0xff] %v433
        %s435 = sand.u32 %s118, 1
        %s436 = scalar_lea.sflag [#allocation4], %s435
        %s437 = sand.u32 %s118, 1
        %s438 = smul.addr %s437, 8
        %s439 = scalar_lea.vmem [#allocation5], %s438
        // Predicated region
        $region41: #{tpu_custom_call.1} parent=35 // pred_check
          %p440 = pneg %p128
        $region42: #{tpu_custom_call.1} parent=35 // pred_check_branch
          %442 = sbr.rel (%p440) target = $region44
        $region43: #{tpu_custom_call.1} parent=35 // pred_region
          %s444 = ssub.s32 128, 128
          %445 = vsyncadd %s436, %s444
          %s446 = smul.addr %s21, 128
          %s447 = scalar_lea.hbm %s4, %s446
          %s449 = sshll.u32 %s439, 4
          %s450 = int_to_ptr.vmem [resolvable:$true] %s449
          %452 = dma.vmem_to_hbm [thread:$0]  %s450, 128, %s447, %s436
        $region44: #{tpu_custom_call.1} parent=35 // pred_fallthru
          _
      $region36: #{tpu_custom_call.1} parent=5 // pred_fallthru
        _
      %p453 = scmp.le.s32.totalorder 2, %s16
      // Predicated region
      $region45: #{tpu_custom_call.1} parent=5 // pred_check
        %p454 = pneg %p453
      $region46: #{tpu_custom_call.1} parent=5 // pred_check_branch
        %456 = sbr.rel (%p454) target = $region48
      $region47: #{tpu_custom_call.1} parent=5 // pred_region
        %s457 = ssub.s32 %s16, 2
        // Predicated region
        $region49: #{tpu_custom_call.1} parent=47 // pred_check
          %p458 = pneg %p134
        $region50: #{tpu_custom_call.1} parent=47 // pred_check_branch
          %460 = sbr.rel (%p458) target = $region52
        $region51: #{tpu_custom_call.1} parent=47 // pred_region
          %s461 = sand.u32 %s119, 1
          %s462 = scalar_lea.sflag [#allocation4], %s461
          %s463 = sand.u32 %s119, 1
          %s464 = smul.addr %s463, 8
          %s465 = scalar_lea.vmem [#allocation5], %s464
          %466 = dma.done %s462, 128
        $region52: #{tpu_custom_call.1} parent=47 // pred_fallthru
          _
      $region48: #{tpu_custom_call.1} parent=5 // pred_fallthru
        _
    $region6: #{tpu_custom_call.1} parent=1 // loop_footer
      %s20 = sadd.s32 1, %s16
    $region7: #{tpu_custom_call.1} parent=1 // loop_footer_branch
      %15 = sbr.rel target = $region3
    $region8: #{tpu_custom_call.1} parent=1 // loop_exit
      _
    %467 = vsyncpa [#allocation3], 1
    %s468 = scalar_lea.sflag [#allocation3], 1
    %469 = vsyncpa %s468, 1
    %470 = vsyncpa [#allocation4], 1
    %s471 = scalar_lea.sflag [#allocation4], 1
    %472 = vsyncpa %s471, 1

</llo_original>
